<compile_context>
chip_gen: v7x
topology: tpu7x:2x2x1
jax: 0.10.0
libtpu: 0.0.40
codegen_flags: <defaults>
</compile_context>

<pallas_src>
import numpy as np
import jax
import jax.numpy as jnp
from jax.experimental import pallas as pl
from jax.experimental.pallas import tpu as pltpu


def _round_up(n, m):
    return ((n + m - 1) // m) * m


def make_bspline_kernel(centers, zoom, pan, order, grid_count, in_size, block_b):
    """Build a Pallas kernel closure over the static spline knot positions.

    Kernel-side layout: batch on lanes, features on sublanes.
      x_ref  : (in_size, block_b)              f32
      w2t_ref: (o_pad, grid_count * in_size)   folded coeff*weight matrix
      out_ref: (o_pad, block_b)                f32 (lane-dense output tile)
    """
    centers = [float(c) for c in centers]        # static python floats
    center_count = len(centers)
    zoom = float(zoom)
    pan = float(pan)

    def kernel(x_ref, w2t_ref, out_ref):
        x = x_ref[...]                                   # (I, BM) f32
        xt = jnp.tanh(x) * zoom + pan                    # squash into grid range

        # One comparison per knot (shared), degree-0 bases by arithmetic diff:
        #   1{c_i <= x < c_{i+1}} = 1{x >= c_i} - 1{x >= c_{i+1}}
        ge = [(xt >= centers[i]).astype(jnp.float32) for i in range(center_count)]
        b = [ge[i] - ge[i + 1] for i in range(center_count - 1)]

        # (x - c_i) computed once, reused by every recursion level.
        dx = [xt - centers[i] for i in range(center_count)]

        # Cox-de Boor recursion, fully unrolled (order / grid_count are static).
        # Knot-difference reciprocals are trace-time Python floats: no divides.
        # Note: (c_{i+k+1} - x) * r_hi * b[i+1] == -dx[i+k+1] * r_hi * b[i+1].
        for k in range(1, order + 1):
            new_b = []
            for i in range(center_count - k - 1):
                d_lo = centers[i + k] - centers[i]
                d_hi = centers[i + k + 1] - centers[i + 1]
                left = dx[i] * b[i]
                right = dx[i + k + 1] * b[i + 1]
                if abs(d_lo - d_hi) <= 1e-6 * max(abs(d_lo), abs(d_hi)):
                    # Uniform knot spacing (linspace centers): factor the scale.
                    new_b.append((left - right) * (1.0 / d_lo))
                else:
                    new_b.append(left * (1.0 / d_lo) - right * (1.0 / d_hi))
            b = new_b

        # b: grid_count arrays of shape (I, BM).  Concatenate along the sublane
        # axis: row index = g*I + i, matching the W2T column layout.  No
        # cross-lane concat / relayout on the hot path.
        spline = jnp.concatenate(b, axis=0)              # (G*I, BM)
        spline = spline.astype(w2t_ref.dtype)            # bf16 MXU path if enabled

        # Hot path: single MXU contraction; output kept batch-on-lanes so the
        # store is unmasked and lane-dense even for small output_size.
        out_ref[...] = jnp.dot(
            w2t_ref[...], spline, preferred_element_type=jnp.float32
        )

    return kernel


def custom_bspline_forward(x, weights, coefficients, *, order, grid_range,
                           grid_count, block_b=512, mxu_dtype=jnp.float32):
    """Pallas implementation of CustomBSplineLayer.forward.

    x:            (B, input_size)                        f32
    weights:      (output_size, input_size)              f32
    coefficients: (output_size, input_size, grid_count)  f32
    returns:      (B, output_size)                       f32

    mxu_dtype: set to jnp.bfloat16 on v6e/v7x to halve W2/spline MXU bytes
    (re-validate tolerance); default f32 for exact parity with the reference.
    """
    out_size, in_size = weights.shape
    center_count = grid_count + order + 1
    end_center = grid_range[-1] + (grid_range[-1] - grid_range[0]) * (order + 1) / (
        grid_count - 1
    )
    centers = np.linspace(grid_range[0], end_center, center_count).astype(np.float32)
    zoom = (grid_range[-1] - grid_range[0]) / 2.0
    pan = (grid_range[-1] + grid_range[0]) / 2.0

    # Fold spline coefficients and linear weights into one matrix (JAX glue):
    #   out[b, o] = sum_{i,g} spline_g(x[b,i]) * coefficients[o,i,g] * weights[o,i]
    #   W2T[o, g*I + i] = coefficients[o, i, g] * weights[o, i]
    w2t = coefficients.astype(jnp.float32) * weights.astype(jnp.float32)[:, :, None]
    w2t = jnp.transpose(w2t, (0, 2, 1)).reshape(out_size, grid_count * in_size)

    # Pad output_size up to a sublane multiple (8) so the (o_pad, block_b)
    # output tile packs cleanly; the lane axis of the output is the batch tile.
    o_pad = max(8, _round_up(out_size, 8))
    if o_pad != out_size:
        w2t = jnp.pad(w2t, ((0, o_pad - out_size), (0, 0)))
    w2t = w2t.astype(mxu_dtype)

    # Batch tile: multiple of 128 (batch sits on the lane axis inside the
    # kernel), capped so tiny batches don't over-pad.
    B = x.shape[0]
    block_b = max(128, (int(block_b) // 128) * 128)
    block_b = min(block_b, _round_up(B, 128))
    b_pad = _round_up(B, block_b)

    # Layout plumbing (wrapper side): transpose to (I, B) and zero-pad the
    # batch tail; padded columns are computed and sliced off afterwards.
    xt = jnp.transpose(x.astype(jnp.float32))
    if b_pad != B:
        xt = jnp.pad(xt, ((0, 0), (0, b_pad - B)))

    kernel = make_bspline_kernel(
        centers, zoom, pan, order, grid_count, in_size, block_b
    )

    # TODO(synk): for very large (grid_count*in_size, output_size) layers, tile
    # the contraction with an extra "arbitrary" grid axis + VMEM accumulator
    # instead of keeping the whole W2T block resident (v7x has only 64 MiB VMEM).
    out_t = pl.pallas_call(
        kernel,
        out_shape=jax.ShapeDtypeStruct((o_pad, b_pad), jnp.float32),
        grid=(b_pad // block_b,),
        in_specs=[
            pl.BlockSpec((in_size, block_b), lambda b: (0, b)),
            # Constant block index -> W2T is fetched once and stays resident.
            pl.BlockSpec((o_pad, grid_count * in_size), lambda b: (0, 0)),
        ],
        out_specs=pl.BlockSpec((o_pad, block_b), lambda b: (0, b)),
        compiler_params=pltpu.CompilerParams(
            dimension_semantics=("parallel",),  # shards batch tiles across TCs
        ),
    )(xt, w2t)

    # Undo padding / transposition (plain-JAX glue).
    return out_t[:out_size, :B].T


def reference_forward(x, weights, coefficients, *, order, grid_range, grid_count):
    """Pure-JAX mirror of the PyTorch module semantics (for verification)."""
    out_size, in_size = weights.shape
    center_count = grid_count + order + 1
    end_center = grid_range[-1] + (grid_range[-1] - grid_range[0]) * (order + 1) / (
        grid_count - 1
    )
    centers = np.linspace(grid_range[0], end_center, center_count).astype(np.float32)
    zoom = (grid_range[-1] - grid_range[0]) / 2.0
    pan = (grid_range[-1] + grid_range[0]) / 2.0

    xt = jnp.tanh(x) * zoom + pan                                   # (B, I)
    last_b = jnp.stack(
        [
            ((xt >= centers[i]) & (xt < centers[i + 1])).astype(jnp.float32)
            for i in range(center_count - 1)
        ],
        axis=2,
    )                                                               # (B, I, C-1)
    for k in range(1, order + 1):
        last_b = jnp.stack(
            [
                (xt - centers[i]) / (centers[i + k] - centers[i]) * last_b[:, :, i]
                + (centers[i + k + 1] - xt)
                / (centers[i + k + 1] - centers[i + 1]) * last_b[:, :, i + 1]
                for i in range(center_count - k - 1)
            ],
            axis=2,
        )
    spline_values = last_b                                          # (B, I, G)
    transformed_x = jnp.einsum("big,oig->boi", spline_values, coefficients)
    return jnp.einsum("boi,oi->bo", transformed_x, weights)


if __name__ == "__main__":
    # Small shapes consistent with the module's dense (batch, input_size) input.
    batch = 8
    input_size = 8
    output_size = 4
    order = 3
    grid_range = [-1.0, 1.0]
    grid_count = 5

    key = jax.random.PRNGKey(0)
    kx, kw, kc = jax.random.split(key, 3)

    x = jax.random.normal(kx, (batch, input_size), dtype=jnp.float32)
    # nn.Parameter(torch.randn(output_size, input_size))
    weights = jax.random.normal(kw, (output_size, input_size), dtype=jnp.float32)
    # per-(output, input) BSplineBasisFunction coefficients: randn(grid_count) * 0.1
    coefficients = (
        jax.random.normal(kc, (output_size, input_size, grid_count), dtype=jnp.float32)
        * 0.1
    )

    out = custom_bspline_forward(
        x, weights, coefficients,
        order=order, grid_range=grid_range, grid_count=grid_count, block_b=512,
    )
    out = jax.block_until_ready(out)

    ref = reference_forward(
        x, weights, coefficients,
        order=order, grid_range=grid_range, grid_count=grid_count,
    )
    ref = jax.block_until_ready(ref)

    assert out.shape == (batch, output_size)
    np.testing.assert_allclose(np.asarray(out), np.asarray(ref), rtol=1e-4, atol=1e-5)

    print("KERNEL_OK")
</pallas_src>

<mosaic_0001>
module attributes {stable_mosaic.version = 11 : i64} {
  func.func @kernel(%arg0: i32, %arg1: memref<8x128xf32, #tpu.memory_space<vmem>>, %arg2: memref<8x40xf32, #tpu.memory_space<vmem>>, %arg3: memref<8x128xf32, #tpu.memory_space<vmem>>) attributes {dimension_semantics = [#tpu.dimension_semantics<parallel>], iteration_bounds = array<i64: 1>, scalar_prefetch = 0 : i64, scratch_operands = 0 : i64, tpu.core_type = #tpu.core_type<tc>, window_params = [{transform_indices = @transform_0, window_bounds = array<i64: 8, 128>}, {pipeline_mode = #tpu.pipeline_mode<synchronous>, transform_indices = @transform_1, window_bounds = array<i64: 8, 40>}, {transform_indices = @transform_2, window_bounds = array<i64: 8, 128>}]} {
    %c0 = arith.constant 0 : index
    %c0_0 = arith.constant 0 : index
    %0 = vector.load %arg1[%c0, %c0_0] : memref<8x128xf32, #tpu.memory_space<vmem>>, vector<8x128xf32>
    %1 = math.tanh %0 : vector<8x128xf32>
    %cst = arith.constant 1.000000e+00 : f32
    %2 = vector.broadcast %cst : f32 to vector<8x128xf32>
    %3 = arith.mulf %1, %2 : vector<8x128xf32>
    %cst_1 = arith.constant 0.000000e+00 : f32
    %4 = vector.broadcast %cst_1 : f32 to vector<8x128xf32>
    %5 = arith.addf %3, %4 : vector<8x128xf32>
    %cst_2 = arith.constant -1.000000e+00 : f32
    %6 = vector.broadcast %cst_2 : f32 to vector<8x128xf32>
    %7 = arith.cmpf oge, %5, %6 : vector<8x128xf32>
    %8 = arith.extui %7 : vector<8x128xi1> to vector<8x128xi32>
    %9 = arith.sitofp %8 : vector<8x128xi32> to vector<8x128xf32>
    %cst_3 = arith.constant -5.000000e-01 : f32
    %10 = vector.broadcast %cst_3 : f32 to vector<8x128xf32>
    %11 = arith.cmpf oge, %5, %10 : vector<8x128xf32>
    %12 = arith.extui %11 : vector<8x128xi1> to vector<8x128xi32>
    %13 = arith.sitofp %12 : vector<8x128xi32> to vector<8x128xf32>
    %cst_4 = arith.constant 0.000000e+00 : f32
    %14 = vector.broadcast %cst_4 : f32 to vector<8x128xf32>
    %15 = arith.cmpf oge, %5, %14 : vector<8x128xf32>
    %16 = arith.extui %15 : vector<8x128xi1> to vector<8x128xi32>
    %17 = arith.sitofp %16 : vector<8x128xi32> to vector<8x128xf32>
    %cst_5 = arith.constant 5.000000e-01 : f32
    %18 = vector.broadcast %cst_5 : f32 to vector<8x128xf32>
    %19 = arith.cmpf oge, %5, %18 : vector<8x128xf32>
    %20 = arith.extui %19 : vector<8x128xi1> to vector<8x128xi32>
    %21 = arith.sitofp %20 : vector<8x128xi32> to vector<8x128xf32>
    %cst_6 = arith.constant 1.000000e+00 : f32
    %22 = vector.broadcast %cst_6 : f32 to vector<8x128xf32>
    %23 = arith.cmpf oge, %5, %22 : vector<8x128xf32>
    %24 = arith.extui %23 : vector<8x128xi1> to vector<8x128xi32>
    %25 = arith.sitofp %24 : vector<8x128xi32> to vector<8x128xf32>
    %cst_7 = arith.constant 1.500000e+00 : f32
    %26 = vector.broadcast %cst_7 : f32 to vector<8x128xf32>
    %27 = arith.cmpf oge, %5, %26 : vector<8x128xf32>
    %28 = arith.extui %27 : vector<8x128xi1> to vector<8x128xi32>
    %29 = arith.sitofp %28 : vector<8x128xi32> to vector<8x128xf32>
    %cst_8 = arith.constant 2.000000e+00 : f32
    %30 = vector.broadcast %cst_8 : f32 to vector<8x128xf32>
    %31 = arith.cmpf oge, %5, %30 : vector<8x128xf32>
    %32 = arith.extui %31 : vector<8x128xi1> to vector<8x128xi32>
    %33 = arith.sitofp %32 : vector<8x128xi32> to vector<8x128xf32>
    %cst_9 = arith.constant 2.500000e+00 : f32
    %34 = vector.broadcast %cst_9 : f32 to vector<8x128xf32>
    %35 = arith.cmpf oge, %5, %34 : vector<8x128xf32>
    %36 = arith.extui %35 : vector<8x128xi1> to vector<8x128xi32>
    %37 = arith.sitofp %36 : vector<8x128xi32> to vector<8x128xf32>
    %cst_10 = arith.constant 3.000000e+00 : f32
    %38 = vector.broadcast %cst_10 : f32 to vector<8x128xf32>
    %39 = arith.cmpf oge, %5, %38 : vector<8x128xf32>
    %40 = arith.extui %39 : vector<8x128xi1> to vector<8x128xi32>
    %41 = arith.sitofp %40 : vector<8x128xi32> to vector<8x128xf32>
    %42 = arith.subf %9, %13 : vector<8x128xf32>
    %43 = arith.subf %13, %17 : vector<8x128xf32>
    %44 = arith.subf %17, %21 : vector<8x128xf32>
    %45 = arith.subf %21, %25 : vector<8x128xf32>
    %46 = arith.subf %25, %29 : vector<8x128xf32>
    %47 = arith.subf %29, %33 : vector<8x128xf32>
    %48 = arith.subf %33, %37 : vector<8x128xf32>
    %49 = arith.subf %37, %41 : vector<8x128xf32>
    %cst_11 = arith.constant -1.000000e+00 : f32
    %50 = vector.broadcast %cst_11 : f32 to vector<8x128xf32>
    %51 = arith.subf %5, %50 : vector<8x128xf32>
    %cst_12 = arith.constant -5.000000e-01 : f32
    %52 = vector.broadcast %cst_12 : f32 to vector<8x128xf32>
    %53 = arith.subf %5, %52 : vector<8x128xf32>
    %cst_13 = arith.constant 0.000000e+00 : f32
    %54 = vector.broadcast %cst_13 : f32 to vector<8x128xf32>
    %55 = arith.subf %5, %54 : vector<8x128xf32>
    %cst_14 = arith.constant 5.000000e-01 : f32
    %56 = vector.broadcast %cst_14 : f32 to vector<8x128xf32>
    %57 = arith.subf %5, %56 : vector<8x128xf32>
    %cst_15 = arith.constant 1.000000e+00 : f32
    %58 = vector.broadcast %cst_15 : f32 to vector<8x128xf32>
    %59 = arith.subf %5, %58 : vector<8x128xf32>
    %cst_16 = arith.constant 1.500000e+00 : f32
    %60 = vector.broadcast %cst_16 : f32 to vector<8x128xf32>
    %61 = arith.subf %5, %60 : vector<8x128xf32>
    %cst_17 = arith.constant 2.000000e+00 : f32
    %62 = vector.broadcast %cst_17 : f32 to vector<8x128xf32>
    %63 = arith.subf %5, %62 : vector<8x128xf32>
    %cst_18 = arith.constant 2.500000e+00 : f32
    %64 = vector.broadcast %cst_18 : f32 to vector<8x128xf32>
    %65 = arith.subf %5, %64 : vector<8x128xf32>
    %cst_19 = arith.constant 3.000000e+00 : f32
    %66 = vector.broadcast %cst_19 : f32 to vector<8x128xf32>
    %67 = arith.subf %5, %66 : vector<8x128xf32>
    %68 = arith.mulf %51, %42 : vector<8x128xf32>
    %69 = arith.mulf %55, %43 : vector<8x128xf32>
    %70 = arith.subf %68, %69 : vector<8x128xf32>
    %cst_20 = arith.constant 2.000000e+00 : f32
    %71 = vector.broadcast %cst_20 : f32 to vector<8x128xf32>
    %72 = arith.mulf %70, %71 : vector<8x128xf32>
    %73 = arith.mulf %53, %43 : vector<8x128xf32>
    %74 = arith.mulf %57, %44 : vector<8x128xf32>
    %75 = arith.subf %73, %74 : vector<8x128xf32>
    %cst_21 = arith.constant 2.000000e+00 : f32
    %76 = vector.broadcast %cst_21 : f32 to vector<8x128xf32>
    %77 = arith.mulf %75, %76 : vector<8x128xf32>
    %78 = arith.mulf %55, %44 : vector<8x128xf32>
    %79 = arith.mulf %59, %45 : vector<8x128xf32>
    %80 = arith.subf %78, %79 : vector<8x128xf32>
    %cst_22 = arith.constant 2.000000e+00 : f32
    %81 = vector.broadcast %cst_22 : f32 to vector<8x128xf32>
    %82 = arith.mulf %80, %81 : vector<8x128xf32>
    %83 = arith.mulf %57, %45 : vector<8x128xf32>
    %84 = arith.mulf %61, %46 : vector<8x128xf32>
    %85 = arith.subf %83, %84 : vector<8x128xf32>
    %cst_23 = arith.constant 2.000000e+00 : f32
    %86 = vector.broadcast %cst_23 : f32 to vector<8x128xf32>
    %87 = arith.mulf %85, %86 : vector<8x128xf32>
    %88 = arith.mulf %59, %46 : vector<8x128xf32>
    %89 = arith.mulf %63, %47 : vector<8x128xf32>
    %90 = arith.subf %88, %89 : vector<8x128xf32>
    %cst_24 = arith.constant 2.000000e+00 : f32
    %91 = vector.broadcast %cst_24 : f32 to vector<8x128xf32>
    %92 = arith.mulf %90, %91 : vector<8x128xf32>
    %93 = arith.mulf %61, %47 : vector<8x128xf32>
    %94 = arith.mulf %65, %48 : vector<8x128xf32>
    %95 = arith.subf %93, %94 : vector<8x128xf32>
    %cst_25 = arith.constant 2.000000e+00 : f32
    %96 = vector.broadcast %cst_25 : f32 to vector<8x128xf32>
    %97 = arith.mulf %95, %96 : vector<8x128xf32>
    %98 = arith.mulf %63, %48 : vector<8x128xf32>
    %99 = arith.mulf %67, %49 : vector<8x128xf32>
    %100 = arith.subf %98, %99 : vector<8x128xf32>
    %cst_26 = arith.constant 2.000000e+00 : f32
    %101 = vector.broadcast %cst_26 : f32 to vector<8x128xf32>
    %102 = arith.mulf %100, %101 : vector<8x128xf32>
    %103 = arith.mulf %51, %72 : vector<8x128xf32>
    %104 = arith.mulf %57, %77 : vector<8x128xf32>
    %105 = arith.subf %103, %104 : vector<8x128xf32>
    %cst_27 = arith.constant 1.000000e+00 : f32
    %106 = vector.broadcast %cst_27 : f32 to vector<8x128xf32>
    %107 = arith.mulf %105, %106 : vector<8x128xf32>
    %108 = arith.mulf %53, %77 : vector<8x128xf32>
    %109 = arith.mulf %59, %82 : vector<8x128xf32>
    %110 = arith.subf %108, %109 : vector<8x128xf32>
    %cst_28 = arith.constant 1.000000e+00 : f32
    %111 = vector.broadcast %cst_28 : f32 to vector<8x128xf32>
    %112 = arith.mulf %110, %111 : vector<8x128xf32>
    %113 = arith.mulf %55, %82 : vector<8x128xf32>
    %114 = arith.mulf %61, %87 : vector<8x128xf32>
    %115 = arith.subf %113, %114 : vector<8x128xf32>
    %cst_29 = arith.constant 1.000000e+00 : f32
    %116 = vector.broadcast %cst_29 : f32 to vector<8x128xf32>
    %117 = arith.mulf %115, %116 : vector<8x128xf32>
    %118 = arith.mulf %57, %87 : vector<8x128xf32>
    %119 = arith.mulf %63, %92 : vector<8x128xf32>
    %120 = arith.subf %118, %119 : vector<8x128xf32>
    %cst_30 = arith.constant 1.000000e+00 : f32
    %121 = vector.broadcast %cst_30 : f32 to vector<8x128xf32>
    %122 = arith.mulf %120, %121 : vector<8x128xf32>
    %123 = arith.mulf %59, %92 : vector<8x128xf32>
    %124 = arith.mulf %65, %97 : vector<8x128xf32>
    %125 = arith.subf %123, %124 : vector<8x128xf32>
    %cst_31 = arith.constant 1.000000e+00 : f32
    %126 = vector.broadcast %cst_31 : f32 to vector<8x128xf32>
    %127 = arith.mulf %125, %126 : vector<8x128xf32>
    %128 = arith.mulf %61, %97 : vector<8x128xf32>
    %129 = arith.mulf %67, %102 : vector<8x128xf32>
    %130 = arith.subf %128, %129 : vector<8x128xf32>
    %cst_32 = arith.constant 1.000000e+00 : f32
    %131 = vector.broadcast %cst_32 : f32 to vector<8x128xf32>
    %132 = arith.mulf %130, %131 : vector<8x128xf32>
    %133 = arith.mulf %51, %107 : vector<8x128xf32>
    %134 = arith.mulf %59, %112 : vector<8x128xf32>
    %135 = arith.subf %133, %134 : vector<8x128xf32>
    %cst_33 = arith.constant 0.666666686 : f32
    %136 = vector.broadcast %cst_33 : f32 to vector<8x128xf32>
    %137 = arith.mulf %135, %136 : vector<8x128xf32>
    %138 = arith.mulf %53, %112 : vector<8x128xf32>
    %139 = arith.mulf %61, %117 : vector<8x128xf32>
    %140 = arith.subf %138, %139 : vector<8x128xf32>
    %cst_34 = arith.constant 0.666666686 : f32
    %141 = vector.broadcast %cst_34 : f32 to vector<8x128xf32>
    %142 = arith.mulf %140, %141 : vector<8x128xf32>
    %143 = arith.mulf %55, %117 : vector<8x128xf32>
    %144 = arith.mulf %63, %122 : vector<8x128xf32>
    %145 = arith.subf %143, %144 : vector<8x128xf32>
    %cst_35 = arith.constant 0.666666686 : f32
    %146 = vector.broadcast %cst_35 : f32 to vector<8x128xf32>
    %147 = arith.mulf %145, %146 : vector<8x128xf32>
    %148 = arith.mulf %57, %122 : vector<8x128xf32>
    %149 = arith.mulf %65, %127 : vector<8x128xf32>
    %150 = arith.subf %148, %149 : vector<8x128xf32>
    %cst_36 = arith.constant 0.666666686 : f32
    %151 = vector.broadcast %cst_36 : f32 to vector<8x128xf32>
    %152 = arith.mulf %150, %151 : vector<8x128xf32>
    %153 = arith.mulf %59, %127 : vector<8x128xf32>
    %154 = arith.mulf %67, %132 : vector<8x128xf32>
    %155 = arith.subf %153, %154 : vector<8x128xf32>
    %cst_37 = arith.constant 0.666666686 : f32
    %156 = vector.broadcast %cst_37 : f32 to vector<8x128xf32>
    %157 = arith.mulf %155, %156 : vector<8x128xf32>
    %158 = tpu.concatenate %137, %142, %147, %152, %157 in 0 : vector<8x128xf32>, vector<8x128xf32>, vector<8x128xf32>, vector<8x128xf32>, vector<8x128xf32> -> vector<40x128xf32>
    %c0_38 = arith.constant 0 : index
    %c0_39 = arith.constant 0 : index
    %159 = vector.load %arg2[%c0_38, %c0_39] : memref<8x40xf32, #tpu.memory_space<vmem>>, vector<8x40xf32>
    %cst_40 = arith.constant dense<0.000000e+00> : vector<8x128xf32>
    %160 = tpu.matmul %159, %158, %cst_40 {dimension_numbers = #tpu.dot_dimension_numbers<[1], [0], [0], [1], [0, 0, 1, 1], [], []>} : vector<8x40xf32>, vector<40x128xf32>, vector<8x128xf32> -> vector<8x128xf32>
    %c0_41 = arith.constant 0 : index
    %c0_42 = arith.constant 0 : index
    %161 = vector.load %arg3[%c0_41, %c0_42] : memref<8x128xf32, #tpu.memory_space<vmem>>, vector<8x128xf32>
    tpu.vector_store %arg3[%c0_41, %c0_42], %160 {strides = array<i32>} : memref<8x128xf32, #tpu.memory_space<vmem>>, vector<8x128xf32>,
    return
  }
  func.func @transform_0(%arg0: i32) -> (i32, i32) {
    %c0_i32 = arith.constant 0 : i32
    %c0_i32_0 = arith.constant 0 : i32
    return %c0_i32, %arg0 : i32, i32
  }
  func.func @transform_1(%arg0: i32) -> (i32, i32) {
    %c0_i32 = arith.constant 0 : i32
    %c0_i32_0 = arith.constant 0 : i32
    %c0_i32_1 = arith.constant 0 : i32
    return %c0_i32, %c0_i32_0 : i32, i32
  }
  func.func @transform_2(%arg0: i32) -> (i32, i32) {
    %c0_i32 = arith.constant 0 : i32
    %c0_i32_0 = arith.constant 0 : i32
    return %c0_i32, %arg0 : i32, i32
  }
}

</mosaic_0001>

<llo_original>
// kernel: tpu_custom_call.1
$region0: #{tpu_custom_call.1}
  #allocation0 [shape = 'u32[]', space=smem, size = 0x4, offset = 0x4, fixed_abs, tag = 'smem constant byte address 0x4 - core index']
  #allocation1 [shape = 'u32[144,128]{1,0:T(1,128)}', space=vmem, size = 0x12000, scoped, tag = 'internal scratch']
  %s0 = inlined_call_operand.hbm [shape: f32[8,128], index: 0, kind: input, shape index: {}]
  %s1 = inlined_call_operand.hbm [shape: f32[8,40], index: 1, kind: input, shape index: {}]
  %s2 = inlined_call_operand.hbm [shape: f32[8,128], index: 2, kind: output, shape index: {}]
  %s3 = sld [smem:[#allocation0]]
  $region26: #{tpu_custom_call.1} parent=0
    _
  %s5 = ssub.s32 1, %s3
  %s6 = scalar_select 0, %s5, %s3
  $region1: #{tpu_custom_call.1} parent=0
    #allocation2 [shape = 'u8[4096]{0}', space=vmem, size = 0x1000, scoped, tag = 'input window, operand 0, single buffered']
    #allocation3 [shape = 's32[1]{0}', space=sflag, size = 0x4, scoped, tag = 'scoped memory for tpu_custom_call.1']
    #allocation4 [shape = 's32[1]{0}', space=sflag, size = 0x4, scoped, tag = 'scoped memory for tpu_custom_call.1']
    #allocation5 [shape = 'u8[4096]{0}', space=vmem, size = 0x1000, scoped, tag = 'input window, operand 1, single buffered']
    #allocation6 [shape = 's32[1]{0}', space=sflag, size = 0x4, scoped, tag = 'scoped memory for tpu_custom_call.1']
    #allocation7 [shape = 'u8[4096]{0}', space=vmem, size = 0x1000, scoped, tag = 'output window, operand 0, single buffered']
    %7 = vsyncpa [#allocation3], 0
    %8 = vsyncpa [#allocation6], 0
    %9 = vsyncpa [#allocation4], 0
    // Predicated region
    $region2: #{tpu_custom_call.1} parent=1 // pred_check
      _
    $region3: #{tpu_custom_call.1} parent=1 // pred_check_branch
      %11 = sbr.rel (0) target = $region5
    $region4: #{tpu_custom_call.1} parent=1 // pred_region
      %s13 = ssub.s32 128, 128
      %14 = vsyncadd [#allocation3], %s13
      %s16 = sshll.u32 [#allocation2], 4
      %s17 = int_to_ptr.vmem [resolvable:$true] %s16
      %19 = dma.hbm_to_vmem [thread:$0]  %s0, 128, %s17, [#allocation3]
    $region5: #{tpu_custom_call.1} parent=1 // pred_fallthru
      _
    // Predicated region
    $region6: #{tpu_custom_call.1} parent=1 // pred_check
      _
    $region7: #{tpu_custom_call.1} parent=1 // pred_check_branch
      %21 = sbr.rel (0) target = $region9
    $region8: #{tpu_custom_call.1} parent=1 // pred_region
      %s23 = ssub.s32 128, 128
      %24 = vsyncadd [#allocation6], %s23
      %s26 = sshll.u32 [#allocation5], 4
      %s27 = int_to_ptr.vmem [resolvable:$true] %s26
      %29 = dma.hbm_to_vmem [thread:$0]  %s1, 128, %s27, [#allocation6]
    $region9: #{tpu_custom_call.1} parent=1 // pred_fallthru
      _
    // Predicated region
    $region10: #{tpu_custom_call.1} parent=1 // pred_check
      _
    $region11: #{tpu_custom_call.1} parent=1 // pred_check_branch
      %31 = sbr.rel (0) target = $region13
    $region12: #{tpu_custom_call.1} parent=1 // pred_region
      %32 = dma.done [#allocation3], 128
    $region13: #{tpu_custom_call.1} parent=1 // pred_fallthru
      _
    // Predicated region
    $region14: #{tpu_custom_call.1} parent=1 // pred_check
      _
    $region15: #{tpu_custom_call.1} parent=1 // pred_check_branch
      %34 = sbr.rel (0) target = $region17
    $region16: #{tpu_custom_call.1} parent=1 // pred_region
      %35 = dma.done [#allocation6], 128
    $region17: #{tpu_custom_call.1} parent=1 // pred_fallthru
      _
    %v36 = vld [vmem:[#allocation2] sm:$0xff]
    %v37 = vtanh.pop %v36
    %v38 = vadd.f32 %v37, 0.0
    %vm39 = vcmp.ge.f32.partialorder %v38, -1.0
    %v40 = vsel %vm39, 1, 0
    %v41 = vcvt.s32.f32 %v40
    %vm42 = vcmp.ge.f32.partialorder %v38, -0.5
    %v43 = vsel %vm42, 1, 0
    %v44 = vcvt.s32.f32 %v43
    %vm45 = vcmp.ge.f32.partialorder %v38, 0.0
    %v46 = vsel %vm45, 1, 0
    %v47 = vcvt.s32.f32 %v46
    %vm48 = vcmp.ge.f32.partialorder %v38, 0.5
    %v49 = vsel %vm48, 1, 0
    %v50 = vcvt.s32.f32 %v49
    %vm51 = vcmp.ge.f32.partialorder %v38, 1.0
    %v52 = vsel %vm51, 1, 0
    %v53 = vcvt.s32.f32 %v52
    %vm54 = vcmp.ge.f32.partialorder %v38, 1.5
    %v55 = vsel %vm54, 1, 0
    %v56 = vcvt.s32.f32 %v55
    %vm57 = vcmp.ge.f32.partialorder %v38, 2.0
    %v58 = vsel %vm57, 1, 0
    %v59 = vcvt.s32.f32 %v58
    %vm60 = vcmp.ge.f32.partialorder %v38, 2.5
    %v61 = vsel %vm60, 1, 0
    %v62 = vcvt.s32.f32 %v61
    %vm63 = vcmp.ge.f32.partialorder %v38, 3.0
    %v64 = vsel %vm63, 1, 0
    %v65 = vcvt.s32.f32 %v64
    %v66 = vsub.f32 %v41, %v44
    %v67 = vsub.f32 %v44, %v47
    %v68 = vsub.f32 %v47, %v50
    %v69 = vsub.f32 %v50, %v53
    %v70 = vsub.f32 %v53, %v56
    %v71 = vsub.f32 %v56, %v59
    %v72 = vsub.f32 %v59, %v62
    %v73 = vsub.f32 %v62, %v65
    %v74 = vsub.f32 %v38, -1.0
    %v75 = vsub.f32 %v38, -0.5
    %v76 = vsub.f32 %v38, 0.5
    %v77 = vsub.f32 %v38, 1.0
    %v78 = vsub.f32 %v38, 1.5
    %v79 = vsub.f32 %v38, 2.0
    %v80 = vsub.f32 %v38, 2.5
    %v81 = vsub.f32 %v38, 3.0
    %v82 = vmul.f32 %v74, %v66
    %v83 = vmul.f32 %v38, %v67
    %v84 = vsub.f32 %v82, %v83
    %v85 = vmul.f32 %v84, 2.0
    %v86 = vmul.f32 %v75, %v67
    %v87 = vmul.f32 %v76, %v68
    %v88 = vsub.f32 %v86, %v87
    %v89 = vmul.f32 %v88, 2.0
    %v90 = vmul.f32 %v38, %v68
    %v91 = vmul.f32 %v77, %v69
    %v92 = vsub.f32 %v90, %v91
    %v93 = vmul.f32 %v92, 2.0
    %v94 = vmul.f32 %v76, %v69
    %v95 = vmul.f32 %v78, %v70
    %v96 = vsub.f32 %v94, %v95
    %v97 = vmul.f32 %v96, 2.0
    %v98 = vmul.f32 %v77, %v70
    %v99 = vmul.f32 %v79, %v71
    %v100 = vsub.f32 %v98, %v99
    %v101 = vmul.f32 %v100, 2.0
    %v102 = vmul.f32 %v78, %v71
    %v103 = vmul.f32 %v80, %v72
    %v104 = vsub.f32 %v102, %v103
    %v105 = vmul.f32 %v104, 2.0
    %v106 = vmul.f32 %v79, %v72
    %v107 = vmul.f32 %v81, %v73
    %v108 = vsub.f32 %v106, %v107
    %v109 = vmul.f32 %v108, 2.0
    %v110 = vmul.f32 %v74, %v85
    %v111 = vmul.f32 %v76, %v89
    %v112 = vsub.f32 %v110, %v111
    %v113 = vmul.f32 %v75, %v89
    %v114 = vmul.f32 %v77, %v93
    %v115 = vsub.f32 %v113, %v114
    %v116 = vmul.f32 %v38, %v93
    %v117 = vmul.f32 %v78, %v97
    %v118 = vsub.f32 %v116, %v117
    %v119 = vmul.f32 %v76, %v97
    %v120 = vmul.f32 %v79, %v101
    %v121 = vsub.f32 %v119, %v120
    %v122 = vmul.f32 %v77, %v101
    %v123 = vmul.f32 %v80, %v105
    %v124 = vsub.f32 %v122, %v123
    %v125 = vmul.f32 %v78, %v105
    %v126 = vmul.f32 %v81, %v109
    %v127 = vsub.f32 %v125, %v126
    %v128 = vmul.f32 %v74, %v112
    %v129 = vmul.f32 %v77, %v115
    %v130 = vsub.f32 %v128, %v129
    %v131 = vmul.f32 %v130, 0.6666667
    %v132 = vmul.f32 %v75, %v115
    %v133 = vmul.f32 %v78, %v118
    %v134 = vsub.f32 %v132, %v133
    %v135 = vmul.f32 %v134, 0.6666667
    %v136 = vmul.f32 %v38, %v118
    %v137 = vmul.f32 %v79, %v121
    %v138 = vsub.f32 %v136, %v137
    %v139 = vmul.f32 %v138, 0.6666667
    %v140 = vmul.f32 %v76, %v121
    %v141 = vmul.f32 %v80, %v124
    %v142 = vsub.f32 %v140, %v141
    %v143 = vmul.f32 %v142, 0.6666667
    %v144 = vmul.f32 %v77, %v124
    %v145 = vmul.f32 %v81, %v127
    %v146 = vsub.f32 %v144, %v145
    %v147 = vmul.f32 %v146, 0.6666667
    %v148 = vld [vmem:[#allocation5] sm:$0xff]
    %vm149 = vcmask 326656
    %v151 = vsel %vm149, %v148, 0
    %153 = vmatprep.subr.mxu0 0.0
    %154 = vmatpush1.msra.mxu0 %v131
    %155 = vmatprep.subr.mxu0 0.0
    %156 = vmatpush1.msra.mxu0 %v135
    %157 = vmatprep.subr.mxu0 0.0
    %158 = vmatpush1.msra.mxu0 %v139
    %159 = vmatprep.subr.mxu0 0.0
    %160 = vmatpush1.msra.mxu0 %v143
    %161 = vmatprep.subr.mxu0 0.0
    %162 = vmatpush1.msra.mxu0 %v147
    %163 = vmatprep.subr.mxu0 0.0
    %164 = vmatpush1.msra.mxu0 0.0
    %165 = vmatprep.subr.mxu0 0.0
    %166 = vmatpush1.msra.mxu0 0.0
    %167 = vmatprep.subr.mxu0 0.0
    %168 = vmatpush1.msra.mxu0 0.0
    %169 = vmatprep.subr.mxu0 0.0
    %170 = vmatpush1.msra.mxu0 0.0
    %171 = vmatprep.subr.mxu0 0.0
    %172 = vmatpush1.msra.mxu0 0.0
    %173 = vmatprep.subr.mxu0 0.0
    %174 = vmatpush1.msra.mxu0 0.0
    %175 = vmatprep.subr.mxu0 0.0
    %176 = vmatpush1.msra.mxu0 0.0
    %177 = vmatprep.subr.mxu0 0.0
    %178 = vmatpush1.msra.mxu0 0.0
    %179 = vmatprep.subr.mxu0 0.0
    %180 = vmatpush1.msra.mxu0 0.0
    %181 = vmatprep.subr.mxu0 0.0
    %182 = vmatpush1.msra.mxu0 0.0
    %183 = vmatprep.subr.mxu0 0.0
    %184 = vmatpush1.msra.mxu0 0.0
    %185 = vmatprep.subr.mxu0 0.0
    %186 = vmatpush1.msra.mxu0 0.0
    %187 = vmatprep.subr.mxu0 0.0
    %188 = vmatpush1.msra.mxu0 0.0
    %189 = vmatprep.subr.mxu0 0.0
    %190 = vmatpush1.msra.mxu0 0.0
    %191 = vmatprep.subr.mxu0 0.0
    %192 = vmatpush1.msra.mxu0 0.0
    %193 = vmatprep.subr.mxu0 0.0
    %194 = vmatpush1.msra.mxu0 0.0
    %195 = vmatprep.subr.mxu0 0.0
    %196 = vmatpush1.msra.mxu0 0.0
    %197 = vmatprep.subr.mxu0 0.0
    %198 = vmatpush1.msra.mxu0 0.0
    %199 = vmatprep.subr.mxu0 0.0
    %200 = vmatpush1.msra.mxu0 0.0
    %201 = vmatprep.subr.mxu0 0.0
    %202 = vmatpush1.msra.mxu0 0.0
    %203 = vmatprep.subr.mxu0 0.0
    %204 = vmatpush1.msra.mxu0 0.0
    %205 = vmatprep.subr.mxu0 0.0
    %206 = vmatpush1.msra.mxu0 0.0
    %207 = vmatprep.subr.mxu0 0.0
    %208 = vmatpush1.msra.mxu0 0.0
    %209 = vmatprep.subr.mxu0 0.0
    %210 = vmatpush1.msra.mxu0 0.0
    %211 = vmatprep.subr.mxu0 0.0
    %212 = vmatpush1.msra.mxu0 0.0
    %213 = vmatprep.subr.mxu0 0.0
    %214 = vmatpush1.msra.mxu0 0.0
    %215 = vmatprep.subr.mxu0 0.0
    %216 = vmatpush1.msra.mxu0 0.0
    %217 = vmatprep.mubr.f32.mxu0 0.0
    %218 = vmatmul.mubr.f32.gmra.mrb[0].mxu0 %v151
    %v219 = vpop.f32.mrb[0].mxu0
    %v220 = vadd.f32 0.0, %v219
    %v221 = vpop.f32.mrb[0].mxu0
    %222 = vdwg.mxu0
    %223 = vst [vmem:[#allocation7] sm:$0xff] %v220
    // Predicated region
    $region18: #{tpu_custom_call.1} parent=1 // pred_check
      _
    $region19: #{tpu_custom_call.1} parent=1 // pred_check_branch
      %225 = sbr.rel (0) target = $region21
    $region20: #{tpu_custom_call.1} parent=1 // pred_region
      %s227 = ssub.s32 128, 128
      %228 = vsyncadd [#allocation4], %s227
      %s230 = sshll.u32 [#allocation7], 4
      %s231 = int_to_ptr.vmem [resolvable:$true] %s230
      %233 = dma.vmem_to_hbm [thread:$0]  %s231, 128, %s2, [#allocation4]
    $region21: #{tpu_custom_call.1} parent=1 // pred_fallthru
      _
    // Predicated region
    $region22: #{tpu_custom_call.1} parent=1 // pred_check
      _
    $region23: #{tpu_custom_call.1} parent=1 // pred_check_branch
      %235 = sbr.rel (0) target = $region25
    $region24: #{tpu_custom_call.1} parent=1 // pred_region
      %236 = dma.done [#allocation4], 128
    $region25: #{tpu_custom_call.1} parent=1 // pred_fallthru
      _
    %237 = vsyncpa [#allocation3], 1
    %238 = vsyncpa [#allocation6], 1
    %239 = vsyncpa [#allocation4], 1

</llo_original>
